<compile_context>
chip_gen: v6e
topology: v6e:2x2x1
jax: 0.10.0
libtpu: 0.0.40
codegen_flags: <defaults>
</compile_context>

<pallas_src>
import functools

import jax
import jax.numpy as jnp
from jax.experimental import pallas as pl
from jax.experimental.pallas import tpu as pltpu


# ----------------------------------------------------------------------------
# Fused Pallas kernel: (patches @ W + b) -> LayerNorm -> * gamma + beta
# ----------------------------------------------------------------------------
def _embed_ln_kernel(p_ref, w_ref, b_ref, g_ref, bt_ref, o_ref):
    # p: (tm, K) patch rows   w: (K, Cemb)   b/g/bt: (1, Cemb)   o: (tm, Cemb)
    y = jnp.dot(p_ref[...], w_ref[...], preferred_element_type=jnp.float32) + b_ref[...]
    mu = jnp.mean(y, axis=-1, keepdims=True)
    var = jnp.mean(jnp.square(y - mu), axis=-1, keepdims=True)
    # LayerNorm eps = 1e-5 (torch default)
    o_ref[...] = (y - mu) * jax.lax.rsqrt(var + 1e-5) * g_ref[...] + bt_ref[...]


# ----------------------------------------------------------------------------
# Module forward (glue in JAX, all compute in one Pallas kernel)
# ----------------------------------------------------------------------------
def overlap_patch_embed(x, params, *, patch_size, stride):
    """x: (B, Cin, H, W) NCHW (torch layout)."""
    B, Cin, H, W = x.shape
    pad = patch_size // 2
    Ho = (H + 2 * pad - patch_size) // stride + 1
    Wo = (W + 2 * pad - patch_size) // stride + 1
    Cemb = params["w_mat"].shape[1]
    K = patch_size * patch_size * Cin
    M = B * Ho * Wo

    # --- im2col glue (data movement only); channel axis stays minor ---------
    # TODO(synk): overlapping-window patch extraction is done as an XLA gather;
    #             a manual-DMA Pallas gather is possible but not worth it here.
    xh = jnp.transpose(x, (0, 2, 3, 1))                               # NHWC
    xp = jnp.pad(xh, ((0, 0), (pad, pad), (pad, pad), (0, 0)))
    kr = jnp.arange(patch_size)
    hi = (jnp.arange(Ho) * stride)[:, None, None, None] + kr[None, None, :, None]
    wi = (jnp.arange(Wo) * stride)[None, :, None, None] + kr[None, None, None, :]
    patches = xp[:, hi, wi, :]                                        # (B,Ho,Wo,k,k,Cin)
    patches = patches.reshape(M, K)                                   # (kh,kw,Cin) flat, C minor

    # --- row tiling: multiple-of-8 sublane tiles, >=2 parallel grid steps ---
    tm = min(512, max(8, (((M + 1) // 2) + 7) // 8 * 8))
    Mp = pl.cdiv(M, tm) * tm
    if Mp != M:
        patches = jnp.pad(patches, ((0, Mp - M), (0, 0)))             # zero rows, LN stays finite

    out = pl.pallas_call(
        _embed_ln_kernel,
        out_shape=jax.ShapeDtypeStruct((Mp, Cemb), jnp.float32),
        grid=(Mp // tm,),
        in_specs=[
            pl.BlockSpec((tm, K), lambda i: (i, 0)),        # patch rows (tiled)
            pl.BlockSpec((K, Cemb), lambda i: (0, 0)),      # conv weight (resident)
            pl.BlockSpec((1, Cemb), lambda i: (0, 0)),      # conv bias
            pl.BlockSpec((1, Cemb), lambda i: (0, 0)),      # ln gamma
            pl.BlockSpec((1, Cemb), lambda i: (0, 0)),      # ln beta
        ],
        out_specs=pl.BlockSpec((tm, Cemb), lambda i: (i, 0)),
        compiler_params=pltpu.CompilerParams(dimension_semantics=("parallel",)),
    )(
        patches,
        params["w_mat"],
        params["conv_b"].reshape(1, Cemb),
        params["ln_g"].reshape(1, Cemb),
        params["ln_b"].reshape(1, Cemb),
    )

    return out[:M].reshape(B, Ho * Wo, Cemb), Ho, Wo


# ----------------------------------------------------------------------------
# Pure-JAX reference (correctness check only)
# ----------------------------------------------------------------------------
def reference(x, params, *, patch_size, stride):
    pad = patch_size // 2
    y = jax.lax.conv_general_dilated(
        x, params["conv_w"], window_strides=(stride, stride),
        padding=((pad, pad), (pad, pad)),
        dimension_numbers=("NCHW", "OIHW", "NCHW"))
    y = y + params["conv_b"][None, :, None, None]
    B, C, Ho, Wo = y.shape
    y = y.reshape(B, C, Ho * Wo).transpose(0, 2, 1)
    mu = y.mean(-1, keepdims=True)
    var = ((y - mu) ** 2).mean(-1, keepdims=True)
    y = (y - mu) / jnp.sqrt(var + 1e-5) * params["ln_g"] + params["ln_b"]
    return y, Ho, Wo


# ----------------------------------------------------------------------------
# Main
# ----------------------------------------------------------------------------
if __name__ == "__main__":
    B, Cin, H, W = 2, 3, 16, 16
    patch_size, stride, Cemb = 7, 4, 32
    K = patch_size * patch_size * Cin

    key = jax.random.PRNGKey(0)
    keys = jax.random.split(key, 5)

    x = jax.random.normal(keys[0], (B, Cin, H, W), dtype=jnp.float32)

    conv_w = 0.05 * jax.random.normal(keys[1], (Cemb, Cin, patch_size, patch_size), jnp.float32)
    conv_b = 0.05 * jax.random.normal(keys[2], (Cemb,), jnp.float32)
    ln_g = 1.0 + 0.05 * jax.random.normal(keys[3], (Cemb,), jnp.float32)
    ln_b = 0.05 * jax.random.normal(keys[4], (Cemb,), jnp.float32)

    params = {
        "conv_w": conv_w,                                              # (Cemb, Cin, k, k) torch layout
        # one-time host permutation to (kh, kw, Cin) -> Cemb flattening (matches patch layout)
        "w_mat": conv_w.transpose(2, 3, 1, 0).reshape(K, Cemb),
        "conv_b": conv_b,
        "ln_g": ln_g,
        "ln_b": ln_b,
    }

    fwd = jax.jit(
        functools.partial(overlap_patch_embed, patch_size=patch_size, stride=stride)
    )
    out, Ho, Wo = fwd(x, params)
    out = jax.block_until_ready(out)

    ref, Ho_ref, Wo_ref = reference(x, params, patch_size=patch_size, stride=stride)

    assert int(Ho) == int(Ho_ref) and int(Wo) == int(Wo_ref)
    assert out.shape == (B, int(Ho_ref) * int(Wo_ref), Cemb)
    # tolerance covers MXU default-precision differences between the Pallas
    # matmul and the XLA conv reference; layout bugs would give O(1) errors.
    assert jnp.allclose(out, ref, rtol=1e-3, atol=1e-3), "mismatch vs reference"

    print("KERNEL_OK")
</pallas_src>

<mosaic_0001>
module attributes {stable_mosaic.version = 11 : i64} {
  func.func @_embed_ln_kernel(%arg0: i32, %arg1: memref<16x147xf32, #tpu.memory_space<vmem>>, %arg2: memref<147x32xf32, #tpu.memory_space<vmem>>, %arg3: memref<1x32xf32, #tpu.memory_space<vmem>>, %arg4: memref<1x32xf32, #tpu.memory_space<vmem>>, %arg5: memref<1x32xf32, #tpu.memory_space<vmem>>, %arg6: memref<16x32xf32, #tpu.memory_space<vmem>>) attributes {dimension_semantics = [#tpu.dimension_semantics<parallel>], iteration_bounds = array<i64: 2>, scalar_prefetch = 0 : i64, scratch_operands = 0 : i64, tpu.core_type = #tpu.core_type<tc>, window_params = [{transform_indices = @transform_0, window_bounds = array<i64: 16, 147>}, {pipeline_mode = #tpu.pipeline_mode<synchronous>, transform_indices = @transform_1, window_bounds = array<i64: 147, 32>}, {pipeline_mode = #tpu.pipeline_mode<synchronous>, transform_indices = @transform_2, window_bounds = array<i64: 1, 32>}, {pipeline_mode = #tpu.pipeline_mode<synchronous>, transform_indices = @transform_3, window_bounds = array<i64: 1, 32>}, {pipeline_mode = #tpu.pipeline_mode<synchronous>, transform_indices = @transform_4, window_bounds = array<i64: 1, 32>}, {transform_indices = @transform_5, window_bounds = array<i64: 16, 32>}]} {
    %c0 = arith.constant 0 : index
    %c0_0 = arith.constant 0 : index
    %0 = vector.load %arg1[%c0, %c0_0] : memref<16x147xf32, #tpu.memory_space<vmem>>, vector<16x147xf32>
    %c0_1 = arith.constant 0 : index
    %c0_2 = arith.constant 0 : index
    %1 = vector.load %arg2[%c0_1, %c0_2] : memref<147x32xf32, #tpu.memory_space<vmem>>, vector<147x32xf32>
    %cst = arith.constant dense<0.000000e+00> : vector<16x32xf32>
    %2 = tpu.matmul %0, %1, %cst {dimension_numbers = #tpu.dot_dimension_numbers<[1], [0], [0], [1], [0, 0, 1, 1], [], []>} : vector<16x147xf32>, vector<147x32xf32>, vector<16x32xf32> -> vector<16x32xf32>
    %c0_3 = arith.constant 0 : index
    %c0_4 = arith.constant 0 : index
    %3 = vector.load %arg3[%c0_3, %c0_4] : memref<1x32xf32, #tpu.memory_space<vmem>>, vector<1x32xf32>
    %4 = vector.broadcast %3 : vector<1x32xf32> to vector<16x32xf32>
    %5 = arith.addf %2, %4 : vector<16x32xf32>
    %cst_5 = arith.constant dense<0.000000e+00> : vector<16xf32>
    %6 = vector.multi_reduction <add>, %5, %cst_5 [1] : vector<16x32xf32> to vector<16xf32>
    %7 = vector.shape_cast %6 : vector<16xf32> to vector<16x1xf32>
    %cst_6 = arith.constant 3.200000e+01 : f32
    %8 = vector.broadcast %cst_6 : f32 to vector<16x1xf32>
    %9 = arith.divf %7, %8 : vector<16x1xf32>
    %10 = vector.broadcast %9 : vector<16x1xf32> to vector<16x32xf32>
    %11 = arith.subf %5, %10 : vector<16x32xf32>
    %12 = arith.mulf %11, %11 : vector<16x32xf32>
    %cst_7 = arith.constant dense<0.000000e+00> : vector<16xf32>
    %13 = vector.multi_reduction <add>, %12, %cst_7 [1] : vector<16x32xf32> to vector<16xf32>
    %14 = vector.shape_cast %13 : vector<16xf32> to vector<16x1xf32>
    %cst_8 = arith.constant 3.200000e+01 : f32
    %15 = vector.broadcast %cst_8 : f32 to vector<16x1xf32>
    %16 = arith.divf %14, %15 : vector<16x1xf32>
    %17 = vector.broadcast %9 : vector<16x1xf32> to vector<16x32xf32>
    %18 = arith.subf %5, %17 : vector<16x32xf32>
    %cst_9 = arith.constant 9.99999974E-6 : f32
    %19 = vector.broadcast %cst_9 : f32 to vector<16x1xf32>
    %20 = arith.addf %16, %19 : vector<16x1xf32>
    %21 = math.rsqrt %20 : vector<16x1xf32>
    %22 = vector.broadcast %21 : vector<16x1xf32> to vector<16x32xf32>
    %23 = arith.mulf %18, %22 : vector<16x32xf32>
    %c0_10 = arith.constant 0 : index
    %c0_11 = arith.constant 0 : index
    %24 = vector.load %arg4[%c0_10, %c0_11] : memref<1x32xf32, #tpu.memory_space<vmem>>, vector<1x32xf32>
    %25 = vector.broadcast %24 : vector<1x32xf32> to vector<16x32xf32>
    %26 = arith.mulf %23, %25 : vector<16x32xf32>
    %c0_12 = arith.constant 0 : index
    %c0_13 = arith.constant 0 : index
    %27 = vector.load %arg5[%c0_12, %c0_13] : memref<1x32xf32, #tpu.memory_space<vmem>>, vector<1x32xf32>
    %28 = vector.broadcast %27 : vector<1x32xf32> to vector<16x32xf32>
    %29 = arith.addf %26, %28 : vector<16x32xf32>
    %c0_14 = arith.constant 0 : index
    %c0_15 = arith.constant 0 : index
    %30 = vector.load %arg6[%c0_14, %c0_15] : memref<16x32xf32, #tpu.memory_space<vmem>>, vector<16x32xf32>
    tpu.vector_store %arg6[%c0_14, %c0_15], %29 {strides = array<i32>} : memref<16x32xf32, #tpu.memory_space<vmem>>, vector<16x32xf32>,
    return
  }
  func.func @transform_0(%arg0: i32) -> (i32, i32) {
    %c0_i32 = arith.constant 0 : i32
    %c0_i32_0 = arith.constant 0 : i32
    return %arg0, %c0_i32 : i32, i32
  }
  func.func @transform_1(%arg0: i32) -> (i32, i32) {
    %c0_i32 = arith.constant 0 : i32
    %c0_i32_0 = arith.constant 0 : i32
    %c0_i32_1 = arith.constant 0 : i32
    return %c0_i32, %c0_i32_0 : i32, i32
  }
  func.func @transform_2(%arg0: i32) -> (i32, i32) {
    %c0_i32 = arith.constant 0 : i32
    %c0_i32_0 = arith.constant 0 : i32
    %c0_i32_1 = arith.constant 0 : i32
    return %c0_i32, %c0_i32_0 : i32, i32
  }
  func.func @transform_3(%arg0: i32) -> (i32, i32) {
    %c0_i32 = arith.constant 0 : i32
    %c0_i32_0 = arith.constant 0 : i32
    %c0_i32_1 = arith.constant 0 : i32
    return %c0_i32, %c0_i32_0 : i32, i32
  }
  func.func @transform_4(%arg0: i32) -> (i32, i32) {
    %c0_i32 = arith.constant 0 : i32
    %c0_i32_0 = arith.constant 0 : i32
    %c0_i32_1 = arith.constant 0 : i32
    return %c0_i32, %c0_i32_0 : i32, i32
  }
  func.func @transform_5(%arg0: i32) -> (i32, i32) {
    %c0_i32 = arith.constant 0 : i32
    %c0_i32_0 = arith.constant 0 : i32
    return %arg0, %c0_i32 : i32, i32
  }
}

</mosaic_0001>

<llo_original>
// kernel: overlap_patch_embed.1
$region0: #{overlap_patch_embed.1}
  #allocation0 [shape = 'u32[]', space=smem, size = 0x4, offset = 0x4, fixed_abs, tag = 'smem constant byte address 0x4 - core index']
  #allocation1 [shape = 'u32[144,128]{1,0:T(1,128)}', space=vmem, size = 0x12000, scoped, tag = 'internal scratch']
  %s0 = inlined_call_operand.vmem [shape: f32[32,147], index: 0, kind: input, shape index: {}]
  %s1 = inlined_call_operand.vmem [shape: f32[147,32], index: 1, kind: input, shape index: {}]
  %s2 = inlined_call_operand.vmem [shape: f32[1,32], index: 2, kind: input, shape index: {}]
  %s3 = inlined_call_operand.vmem [shape: f32[1,32], index: 3, kind: input, shape index: {}]
  %s4 = inlined_call_operand.vmem [shape: f32[1,32], index: 4, kind: input, shape index: {}]
  %s5 = inlined_call_operand.hbm [shape: f32[32,32], index: 5, kind: output, shape index: {}]
  %s6 = sld [smem:[#allocation0]]
  $region53: #{overlap_patch_embed.1} parent=0
    _
  %s8 = ssub.s32 1, %s6
  %s9 = scalar_select 0, %s8, %s6
  $region1: #{overlap_patch_embed.1} parent=0
    #allocation2 [shape = 'u8[16384]{0}', space=vmem, size = 0x4000, scoped, tag = 'output window, operand 0']
    #allocation3 [shape = 's32[2]{0}', space=sflag, size = 0x8, scoped, tag = 'scoped memory for overlap_patch_embed.1']
    %10 = vsyncpa [#allocation3], 0
    %s11 = scalar_lea.sflag [#allocation3], 1
    %12 = vsyncpa %s11, 0
    loop: start=0, step=1, limit=4
    $region2: #{overlap_patch_embed.1} parent=1 // loop_pre_header
      _
    $region3: #{overlap_patch_embed.1} parent=1 // loop_header
      %s14 = sphi 0, %s18
      %p15 = scmp.ge.s32.totalorder %s14, 4
      %s24 = sphi 0, %s26
      %s27 = sphi 0, %s24
      %s28 = sphi 0, %s27
      %s44 = sphi 0, %s28
      %s48 = sphi 0, %s48
      %s50 = sphi 0, %s48
      %s51 = sphi 0, %s50
      %s65 = sphi 0, %s51
      %s69 = sphi 0, %s69
      %s71 = sphi 0, %s69
      %s72 = sphi 0, %s71
      %s86 = sphi 0, %s72
      %s90 = sphi 0, %s90
      %s92 = sphi 0, %s90
      %s93 = sphi 0, %s92
      %s107 = sphi 0, %s93
      %s111 = sphi 0, %s111
      %s113 = sphi 0, %s111
      %s114 = sphi 0, %s113
      %s128 = sphi 0, %s114
      %s134 = sphi 0, %s136
      %s137 = sphi 0, %s134
      %s138 = sphi 0, %s137
      %s154 = sphi 0, %s138
    $region4: #{overlap_patch_embed.1} parent=1 // loop_header_branch
      %17 = sbr.rel (%p15) target = $region8
    $region5: #{overlap_patch_embed.1} parent=1 // loop_body
      %s19 = ssub.s32 %s14, 1
      %s20 = ssub.s32 %s14, 2
      %s21 = sadd.s32 %s14, 1
      %s22 = ssub.s32 %s14, %s21
      %p23 = scmp.eq.s32.totalorder %s22, 0
      %s25 = sadd.s32 %s24, 1
      %s26 = scalar_select %p23, %s24, %s25
      %p29 = pneg %p23
      %p30 = scmp.eq.s32.totalorder %s14, 1
      %p31 = por %p29, %p30
      %p32 = scmp.ne.s32.totalorder %s24, %s27
      %p33 = scmp.eq.s32.totalorder %s14, 0
      %p34 = por %p32, %p33
      %p35 = scmp.ne.s32.totalorder %s24, %s27
      %p36 = scmp.eq.s32.totalorder %s19, 1
      %p37 = por %p35, %p36
      %p38 = scmp.ne.s32.totalorder %s27, %s28
      %p39 = scmp.eq.s32.totalorder %s19, 0
      %p40 = por %p38, %p39
      %p41 = scmp.ne.s32.totalorder %s27, %s28
      %p42 = scmp.eq.s32.totalorder %s20, 1
      %p43 = por %p41, %p42
      %p45 = scmp.ne.s32.totalorder %s28, %s44
      %p46 = scmp.eq.s32.totalorder %s20, 0
      %p47 = por %p45, %p46
      %s49 = sadd.s32 %s48, 1
      %p52 = scmp.eq.s32.totalorder %s14, 1
      %p53 = scmp.ne.s32.totalorder %s48, %s50
      %p54 = scmp.eq.s32.totalorder %s14, 0
      %p55 = por %p53, %p54
      %p56 = scmp.ne.s32.totalorder %s48, %s50
      %p57 = scmp.eq.s32.totalorder %s19, 1
      %p58 = por %p56, %p57
      %p59 = scmp.ne.s32.totalorder %s50, %s51
      %p60 = scmp.eq.s32.totalorder %s19, 0
      %p61 = por %p59, %p60
      %p62 = scmp.ne.s32.totalorder %s50, %s51
      %p63 = scmp.eq.s32.totalorder %s20, 1
      %p64 = por %p62, %p63
      %p66 = scmp.ne.s32.totalorder %s51, %s65
      %p67 = scmp.eq.s32.totalorder %s20, 0
      %p68 = por %p66, %p67
      %s70 = sadd.s32 %s69, 1
      %p73 = scmp.eq.s32.totalorder %s14, 1
      %p74 = scmp.ne.s32.totalorder %s69, %s71
      %p75 = scmp.eq.s32.totalorder %s14, 0
      %p76 = por %p74, %p75
      %p77 = scmp.ne.s32.totalorder %s69, %s71
      %p78 = scmp.eq.s32.totalorder %s19, 1
      %p79 = por %p77, %p78
      %p80 = scmp.ne.s32.totalorder %s71, %s72
      %p81 = scmp.eq.s32.totalorder %s19, 0
      %p82 = por %p80, %p81
      %p83 = scmp.ne.s32.totalorder %s71, %s72
      %p84 = scmp.eq.s32.totalorder %s20, 1
      %p85 = por %p83, %p84
      %p87 = scmp.ne.s32.totalorder %s72, %s86
      %p88 = scmp.eq.s32.totalorder %s20, 0
      %p89 = por %p87, %p88
      %s91 = sadd.s32 %s90, 1
      %p94 = scmp.eq.s32.totalorder %s14, 1
      %p95 = scmp.ne.s32.totalorder %s90, %s92
      %p96 = scmp.eq.s32.totalorder %s14, 0
      %p97 = por %p95, %p96
      %p98 = scmp.ne.s32.totalorder %s90, %s92
      %p99 = scmp.eq.s32.totalorder %s19, 1
      %p100 = por %p98, %p99
      %p101 = scmp.ne.s32.totalorder %s92, %s93
      %p102 = scmp.eq.s32.totalorder %s19, 0
      %p103 = por %p101, %p102
      %p104 = scmp.ne.s32.totalorder %s92, %s93
      %p105 = scmp.eq.s32.totalorder %s20, 1
      %p106 = por %p104, %p105
      %p108 = scmp.ne.s32.totalorder %s93, %s107
      %p109 = scmp.eq.s32.totalorder %s20, 0
      %p110 = por %p108, %p109
      %s112 = sadd.s32 %s111, 1
      %p115 = scmp.eq.s32.totalorder %s14, 1
      %p116 = scmp.ne.s32.totalorder %s111, %s113
      %p117 = scmp.eq.s32.totalorder %s14, 0
      %p118 = por %p116, %p117
      %p119 = scmp.ne.s32.totalorder %s111, %s113
      %p120 = scmp.eq.s32.totalorder %s19, 1
      %p121 = por %p119, %p120
      %p122 = scmp.ne.s32.totalorder %s113, %s114
      %p123 = scmp.eq.s32.totalorder %s19, 0
      %p124 = por %p122, %p123
      %p125 = scmp.ne.s32.totalorder %s113, %s114
      %p126 = scmp.eq.s32.totalorder %s20, 1
      %p127 = por %p125, %p126
      %p129 = scmp.ne.s32.totalorder %s114, %s128
      %p130 = scmp.eq.s32.totalorder %s20, 0
      %p131 = por %p129, %p130
      %s132 = ssub.s32 %s14, %s21
      %p133 = scmp.eq.s32.totalorder %s132, 0
      %s135 = sadd.s32 %s134, 1
      %s136 = scalar_select %p133, %s134, %s135
      %p139 = pneg %p133
      %p140 = scmp.eq.s32.totalorder %s14, 1
      %p141 = por %p139, %p140
      %p142 = scmp.ne.s32.totalorder %s134, %s137
      %p143 = scmp.eq.s32.totalorder %s14, 0
      %p144 = por %p142, %p143
      %p145 = scmp.ne.s32.totalorder %s134, %s137
      %p146 = scmp.eq.s32.totalorder %s19, 1
      %p147 = por %p145, %p146
      %p148 = scmp.ne.s32.totalorder %s137, %s138
      %p149 = scmp.eq.s32.totalorder %s19, 0
      %p150 = por %p148, %p149
      %p151 = scmp.ne.s32.totalorder %s137, %s138
      %p152 = scmp.eq.s32.totalorder %s20, 1
      %p153 = por %p151, %p152
      %p155 = scmp.ne.s32.totalorder %s138, %s154
      %p156 = scmp.eq.s32.totalorder %s20, 0
      %p157 = por %p155, %p156
      %p158 = scmp.le.s32.totalorder 1, %s14
      %p159 = scmp.lt.s32.totalorder %s14, 3
      %p160 = pnand %p158, %p159
      %p161 = pneg %p160
      // Predicated region
      $region9: #{overlap_patch_embed.1} parent=5 // pred_check
        _
      $region10: #{overlap_patch_embed.1} parent=5 // pred_check_branch
        %163 = sbr.rel (%p160) target = $region12
      $region11: #{overlap_patch_embed.1} parent=5 // pred_region
        %s164 = ssub.s32 %s14, 1
        // Predicated region
        $region13: #{overlap_patch_embed.1} parent=11 // pred_check
          %p165 = pneg %p61
        $region14: #{overlap_patch_embed.1} parent=11 // pred_check_branch
          %167 = sbr.rel (%p165) target = $region16
        $region15: #{overlap_patch_embed.1} parent=11 // pred_region
          _
        $region16: #{overlap_patch_embed.1} parent=11 // pred_fallthru
          _
        // Predicated region
        $region17: #{overlap_patch_embed.1} parent=11 // pred_check
          %p168 = pneg %p82
        $region18: #{overlap_patch_embed.1} parent=11 // pred_check_branch
          %170 = sbr.rel (%p168) target = $region20
        $region19: #{overlap_patch_embed.1} parent=11 // pred_region
          _
        $region20: #{overlap_patch_embed.1} parent=11 // pred_fallthru
          _
        // Predicated region
        $region21: #{overlap_patch_embed.1} parent=11 // pred_check
          %p171 = pneg %p103
        $region22: #{overlap_patch_embed.1} parent=11 // pred_check_branch
          %173 = sbr.rel (%p171) target = $region24
        $region23: #{overlap_patch_embed.1} parent=11 // pred_region
          _
        $region24: #{overlap_patch_embed.1} parent=11 // pred_fallthru
          _
        // Predicated region
        $region25: #{overlap_patch_embed.1} parent=11 // pred_check
          %p174 = pneg %p124
        $region26: #{overlap_patch_embed.1} parent=11 // pred_check_branch
          %176 = sbr.rel (%p174) target = $region28
        $region27: #{overlap_patch_embed.1} parent=11 // pred_region
          _
        $region28: #{overlap_patch_embed.1} parent=11 // pred_fallthru
          _
      $region12: #{overlap_patch_embed.1} parent=5 // pred_fallthru
        _
      %p177 = scmp.lt.s32.totalorder %s14, 2
      // Predicated region
      $region29: #{overlap_patch_embed.1} parent=5 // pred_check
        %p178 = pneg %p177
      $region30: #{overlap_patch_embed.1} parent=5 // pred_check_branch
        %180 = sbr.rel (%p178) target = $region32
      $region31: #{overlap_patch_embed.1} parent=5 // pred_region
        // Predicated region
        $region33: #{overlap_patch_embed.1} parent=31 // pred_check
          %p181 = pneg %p34
        $region34: #{overlap_patch_embed.1} parent=31 // pred_check_branch
          %183 = sbr.rel (%p181) target = $region36
        $region35: #{overlap_patch_embed.1} parent=31 // pred_region
          %s184 = smul.u32 2, %s14
          %p185 = scmp.lt.s32.totalorder %s184, 3
          %s186 = scalar_select %p185, %s184, 3
          %s187 = smul.addr %s186, 2
          %s188 = smul.addr %s187, 8
          %s189 = scalar_lea.vmem %s0, %s188
          %s190 = smul.u32 2, %s14
        $region36: #{overlap_patch_embed.1} parent=31 // pred_fallthru
          _
      $region32: #{overlap_patch_embed.1} parent=5 // pred_fallthru
        _
      %p191 = scmp.le.s32.totalorder 1, %s14
      %p192 = scmp.lt.s32.totalorder %s14, 3
      %p193 = pnand %p191, %p192
      %p194 = pneg %p193
      // Predicated region
      $region37: #{overlap_patch_embed.1} parent=5 // pred_check
        _
      $region38: #{overlap_patch_embed.1} parent=5 // pred_check_branch
        %196 = sbr.rel (%p193) target = $region40
      $region39: #{overlap_patch_embed.1} parent=5 // pred_region
        %s197 = ssub.s32 %s14, 1
        %s198 = smul.u32 2, %s19
        %p199 = scmp.lt.s32.totalorder %s198, 3
        %s200 = scalar_select %p199, %s198, 3
        %s201 = smul.addr %s200, 2
        %s202 = smul.addr %s201, 8
        %s203 = scalar_lea.vmem %s0, %s202
        %p204 = pneg %p40
        %p205 = pneg %p37
        %p206 = pneg %p61
        %p207 = pneg %p58
        %p208 = pneg %p82
        %p209 = pneg %p79
        %p210 = pneg %p103
        %p211 = pneg %p100
        %p212 = pneg %p124
        %p213 = pneg %p121
        %p214 = pneg %p150
        %p215 = pneg %p147
        %s216 = sand.u32 %s137, 1
        %s217 = scalar_lea.sflag [#allocation3], %s216
        %s218 = sand.u32 %s137, 1
        %s219 = smul.addr %s218, 16
        %s220 = scalar_lea.vmem [#allocation2], %s219
        %s221 = smul.u32 2, %s19
        %p222 = scmp.lt.s32.totalorder %s221, 3
        %s223 = scalar_select %p222, %s221, 3
        %s224 = smul.addr %s223, 2
        %s225 = smul.addr %s224, 8
        %s226 = scalar_lea.vmem %s0, %s225
        %s227 = smul.u32 2, %s19
        %s228 = smul.u32 2, %s19
        %v229 = vld [vmem:[%s226] sm:$0xff]
        %v230 = vld [vmem:[%s226 + $0x8] sm:$0xff]
        %v231 = vld [vmem:[%s226 + $0x10] sm:$0xff]
        %v232 = vld [vmem:[%s226 + $0x18] sm:$0xff]
        %v233 = vld [vmem:[%s1] sm:$0xff]
        %v234 = vld [vmem:[%s1 + $0x8] sm:$0xff]
        %v235 = vld [vmem:[%s1 + $0x10] sm:$0xff]
        %v236 = vld [vmem:[%s1 + $0x18] sm:$0xff]
        %v237 = vld [vmem:[%s1 + $0x20] sm:$0xff]
        %v238 = vld [vmem:[%s1 + $0x28] sm:$0xff]
        %v239 = vld [vmem:[%s1 + $0x30] sm:$0xff]
        %v240 = vld [vmem:[%s1 + $0x38] sm:$0xff]
        %v241 = vld [vmem:[%s1 + $0x40] sm:$0xff]
        %v242 = vld [vmem:[%s1 + $0x48] sm:$0xff]
        %v243 = vld [vmem:[%s1 + $0x50] sm:$0xff]
        %v244 = vld [vmem:[%s1 + $0x58] sm:$0xff]
        %v245 = vld [vmem:[%s1 + $0x60] sm:$0xff]
        %v246 = vld [vmem:[%s1 + $0x68] sm:$0xff]
        %v247 = vld [vmem:[%s1 + $0x70] sm:$0xff]
        %v248 = vld [vmem:[%s1 + $0x78] sm:$0xff]
        %v249 = vld [vmem:[%s1 + $0x80] sm:$0xff]
        %v250 = vld [vmem:[%s1 + $0x88] sm:$0xff]
        %v251 = vld [vmem:[%s1 + $0x90] sm:$0x7]
        %v252 = vld [vmem:[%s2] sm:$0x1]
        %v254 = vlaneseq
        %v255 = vshrl.u32 %v254, 7
        %v256 = vsub.s32 0, %v255
        %v257 = vrot.slane %v252, %v256
        %vm259 = vcmask 154624
        %v261 = vsel %vm259, %v230, 0
        %v264 = vsel %vm259, %v232, 0
        %vm266 = vcmask 1042432
        %v268 = vsel %vm266, %v251, 0
        %270 = vmatprep.subr.mxu0 0.0
        %271 = vmatpush1.msra.mxu0 %v248
        %272 = vmatprep.subr.mxu0 0.0
        %273 = vmatpush1.msra.mxu0 %v247
        %274 = vmatprep.subr.mxu0 0.0
        %275 = vmatpush1.msra.mxu0 %v246
        %276 = vmatprep.subr.mxu0 0.0
        %277 = vmatpush1.msra.mxu0 %v245
        %278 = vmatprep.subr.mxu0 0.0
        %279 = vmatpush1.msra.mxu0 %v244
        %280 = vmatprep.subr.mxu0 0.0
        %281 = vmatpush1.msra.mxu0 %v243
        %282 = vmatprep.subr.mxu0 0.0
        %283 = vmatpush1.msra.mxu0 %v242
        %284 = vmatprep.subr.mxu0 0.0
        %285 = vmatpush1.msra.mxu0 %v241
        %286 = vmatprep.subr.mxu0 0.0
        %287 = vmatpush1.msra.mxu0 %v240
        %288 = vmatprep.subr.mxu0 0.0
        %289 = vmatpush1.msra.mxu0 %v239
        %290 = vmatprep.subr.mxu0 0.0
        %291 = vmatpush1.msra.mxu0 %v238
        %292 = vmatprep.subr.mxu0 0.0
        %293 = vmatpush1.msra.mxu0 %v237
        %294 = vmatprep.subr.mxu0 0.0
        %295 = vmatpush1.msra.mxu0 %v236
        %296 = vmatprep.subr.mxu0 0.0
        %297 = vmatpush1.msra.mxu0 %v235
        %298 = vmatprep.subr.mxu0 0.0
        %299 = vmatpush1.msra.mxu0 %v234
        %300 = vmatprep.subr.mxu0 0.0
        %301 = vmatpush1.msra.mxu0 %v233
        %302 = vmatprep.subr.mxu0 0.0
        %303 = vmatpush2.msra.mxu0 0.0
        %304 = vmatprep.subr.mxu0 0.0
        %305 = vmatpush2.msra.mxu0 0.0
        %306 = vmatprep.subr.mxu0 0.0
        %307 = vmatpush2.msra.mxu0 0.0
        %308 = vmatprep.subr.mxu0 0.0
        %309 = vmatpush2.msra.mxu0 0.0
        %310 = vmatprep.subr.mxu0 0.0
        %311 = vmatpush2.msra.mxu0 0.0
        %312 = vmatprep.subr.mxu0 0.0
        %313 = vmatpush2.msra.mxu0 0.0
        %314 = vmatprep.subr.mxu0 0.0
        %315 = vmatpush2.msra.mxu0 0.0
        %316 = vmatprep.subr.mxu0 0.0
        %317 = vmatpush2.msra.mxu0 0.0
        %318 = vmatprep.subr.mxu0 0.0
        %319 = vmatpush2.msra.mxu0 0.0
        %320 = vmatprep.subr.mxu0 0.0
        %321 = vmatpush2.msra.mxu0 0.0
        %322 = vmatprep.subr.mxu0 0.0
        %323 = vmatpush2.msra.mxu0 0.0
        %324 = vmatprep.subr.mxu0 0.0
        %325 = vmatpush2.msra.mxu0 0.0
        %326 = vmatprep.subr.mxu0 0.0
        %327 = vmatpush2.msra.mxu0 0.0
        %328 = vmatprep.subr.mxu0 0.0
        %329 = vmatpush2.msra.mxu0 %v268
        %330 = vmatprep.subr.mxu0 0.0
        %331 = vmatpush2.msra.mxu0 %v250
        %332 = vmatprep.subr.mxu0 0.0
        %333 = vmatpush2.msra.mxu0 %v249
        %334 = vmatprep.mubr.f32.mxu0 %v261
        %335 = vmatmul.mubr.f32.gmra.mxu0 %v229
        %v336 = vpop.f32.mrf.mxu0
        %v337 = vadd.f32 %v257, %v336
        %v338 = vpop.f32.mrf.mxu0
        %339 = vmatprep.mubr.f32.mxu0 %v264
        %340 = vmatmul.mubr.f32.gmra.mxu0 %v231
        %v341 = vpop.f32.mrf.mxu0
        %v342 = vadd.f32 %v257, %v341
        %v343 = vpop.f32.mrf.mxu0
        %344 = vdwg.mxu0
        %vm345 = vcmask 261120
        %v346 = vsel %vm345, %v337, 0.0
        %347 = vadd.xlane.f32.xlu0 %v346
        %v348 = vpop.xlane.xlu0 %347
        %v349 = vsel %vm345, %v342, 0.0
        %350 = vadd.xlane.f32.xlu0 %v349
        %v351 = vpop.xlane.xlu0 %350
        %v352 = vrcp.pop 32.0
        %v353 = vmul.f32 %v348, %v352
        %v354 = vmul.f32 %v351, %v352
        %v355 = vsub.f32 %v337, %v353
        %v356 = vsub.f32 %v342, %v354
        %v357 = vmul.f32 %v355, %v355
        %v358 = vmul.f32 %v356, %v356
        %v359 = vsel %vm345, %v357, 0.0
        %360 = vadd.xlane.f32.xlu0 %v359
        %v361 = vpop.xlane.xlu0 %360
        %v362 = vsel %vm345, %v358, 0.0
        %363 = vadd.xlane.f32.xlu0 %v362
        %v364 = vpop.xlane.xlu0 %363
        %v365 = vmul.f32 %v361, %v352
        %v366 = vmul.f32 %v364, %v352
        %v367 = vadd.f32 %v365, 1e-05
        %v368 = vadd.f32 %v366, 1e-05
        %v369 = vrsqrt.pop %v367
        %v370 = vrsqrt.pop %v368
        %v371 = vmul.f32 %v355, %v369
        %v372 = vmul.f32 %v356, %v370
        %v373 = vld [vmem:[%s3] sm:$0x1]
        %v375 = vlaneseq
        %v376 = vshrl.u32 %v375, 7
        %v377 = vsub.s32 0, %v376
        %v378 = vrot.slane %v373, %v377
        %v380 = vmul.f32 %v371, %v378
        %v381 = vmul.f32 %v372, %v378
        %v382 = vld [vmem:[%s4] sm:$0x1]
        %v384 = vlaneseq
        %v385 = vshrl.u32 %v384, 7
        %v386 = vsub.s32 0, %v385
        %v387 = vrot.slane %v382, %v386
        %v389 = vadd.f32 %v380, %v387
        %v390 = vadd.f32 %v381, %v387
        %391 = vst.msk [vmem:[%s220] sm:$0xff] %vm345, %v389
        %392 = vst.msk [vmem:[%s220 + $0x8] sm:$0xff] %vm345, %v390
        %s393 = sand.u32 %s137, 1
        %s394 = scalar_lea.sflag [#allocation3], %s393
        %s395 = sand.u32 %s137, 1
        %s396 = smul.addr %s395, 16
        %s397 = scalar_lea.vmem [#allocation2], %s396
        // Predicated region
        $region41: #{overlap_patch_embed.1} parent=39 // pred_check
          %p398 = pneg %p147
        $region42: #{overlap_patch_embed.1} parent=39 // pred_check_branch
          %400 = sbr.rel (%p398) target = $region44
        $region43: #{overlap_patch_embed.1} parent=39 // pred_region
          %s401 = smul.u32 2, %s19
          %s403 = ssub.s32 256, 256
          %404 = vsyncadd %s394, %s403
          %s405 = smul.addr %s401, 128
          %s406 = scalar_lea.hbm %s5, %s405
          %s407 = sshll.u32 %s397, 4
          %s408 = int_to_ptr.vmem [resolvable:$true] %s407
          %413 = dma.vmem_to_hbm [thread:$0]  %s408, 256, %s406, %s394, 128, 128, 8
        $region44: #{overlap_patch_embed.1} parent=39 // pred_fallthru
          _
      $region40: #{overlap_patch_embed.1} parent=5 // pred_fallthru
        _
      %p414 = scmp.le.s32.totalorder 2, %s14
      // Predicated region
      $region45: #{overlap_patch_embed.1} parent=5 // pred_check
        %p415 = pneg %p414
      $region46: #{overlap_patch_embed.1} parent=5 // pred_check_branch
        %417 = sbr.rel (%p415) target = $region48
      $region47: #{overlap_patch_embed.1} parent=5 // pred_region
        %s418 = ssub.s32 %s14, 2
        // Predicated region
        $region49: #{overlap_patch_embed.1} parent=47 // pred_check
          %p419 = pneg %p153
        $region50: #{overlap_patch_embed.1} parent=47 // pred_check_branch
          %421 = sbr.rel (%p419) target = $region52
        $region51: #{overlap_patch_embed.1} parent=47 // pred_region
          %s422 = sand.u32 %s138, 1
          %s423 = scalar_lea.sflag [#allocation3], %s422
          %s424 = sand.u32 %s138, 1
          %s425 = smul.addr %s424, 16
          %s426 = scalar_lea.vmem [#allocation2], %s425
          %427 = dma.done %s423, 256
        $region52: #{overlap_patch_embed.1} parent=47 // pred_fallthru
          _
      $region48: #{overlap_patch_embed.1} parent=5 // pred_fallthru
        _
    $region6: #{overlap_patch_embed.1} parent=1 // loop_footer
      %s18 = sadd.s32 1, %s14
    $region7: #{overlap_patch_embed.1} parent=1 // loop_footer_branch
      %13 = sbr.rel target = $region3
    $region8: #{overlap_patch_embed.1} parent=1 // loop_exit
      _
    %428 = vsyncpa [#allocation3], 1
    %s429 = scalar_lea.sflag [#allocation3], 1
    %430 = vsyncpa %s429, 1

</llo_original>
